<compile_context>
chip_gen: v7x
topology: tpu7x:2x2x1
jax: 0.10.0
libtpu: 0.0.40
codegen_flags: <defaults>
</compile_context>

<pallas_src>
import jax
import jax.numpy as jnp
from jax import lax
from jax.experimental import pallas as pl
from jax.experimental.pallas import tpu as pltpu

EPS = 1e-12     # F.normalize default eps
HID = 64


def _round_up(v, m):
    return (v + m - 1) // m * m


def _l2_normalize_fast(v):
    # v * rsqrt(max(||v||^2, eps^2)) == v / max(||v||, eps): rsqrt lands on the
    # EUP slot, the multiply on the VPU -> no full-width VALU divide.
    sumsq = jnp.sum(v * v, axis=-1, keepdims=True)
    return v * lax.rsqrt(jnp.maximum(sumsq, EPS * EPS))


def _make_kernel(num_children, use_bf16_tanh):
    act_dt = jnp.bfloat16 if use_bf16_tanh else jnp.float32

    def kernel(*refs):
        x_ref = refs[0]
        m_refs = refs[1:1 + num_children]
        w1_ref, b1_ref, w2a_ref = refs[1 + num_children:4 + num_children]
        w2b_refs = refs[4 + num_children:4 + 2 * num_children]
        b2_ref, w3_ref, b3_ref, out_ref = refs[4 + 2 * num_children:]

        # fc1 + L2 normalize (always f32 for parity with the reference)
        h = jnp.dot(x_ref[...], w1_ref[...],
                    preferred_element_type=jnp.float32) + b1_ref[...]
        h = _l2_normalize_fast(h)

        # tanh(concat([h, m_0..m_{k-1}])) @ W2 + b2
        #   == tanh(h) @ W2a + sum_i tanh(m_i) @ W2b_i + b2   (exact rewrite)
        th = jnp.tanh(h.astype(act_dt))
        h2 = jnp.dot(th, w2a_ref[...].astype(act_dt),
                     preferred_element_type=jnp.float32)
        for m_ref, w2b_ref in zip(m_refs, w2b_refs):
            tm = jnp.tanh(m_ref[...].astype(act_dt))
            h2 = h2 + jnp.dot(tm, w2b_ref[...].astype(act_dt),
                              preferred_element_type=jnp.float32)
        h2 = jnp.tanh((h2 + b2_ref[...]).astype(act_dt))

        # fc3 + L2 normalize; store msg_dim lanes directly (no lane padding)
        h3 = jnp.dot(h2, w3_ref[...].astype(act_dt),
                     preferred_element_type=jnp.float32) + b3_ref[...]
        out_ref[...] = _l2_normalize_fast(h3)

    return kernel


def actor_up_forward(x, msgs, params, *, block_b=2048, use_bf16_tanh=False):
    """x: (B, state_dim); msgs: sequence of (B, msg_dim) child messages."""
    w1, b1, w2a, w2b_list, b2, w3, b3 = params
    msgs = tuple(msgs)
    num_children = len(msgs)
    assert len(w2b_list) == num_children

    B, state_dim = x.shape
    msg_dim = w3.shape[1]
    msg_total = sum(m.shape[1] for m in msgs)

    # Batch tile: as big as block_b allows (amortize per-step overhead) but
    # keep >= 2 grid steps when the batch is big enough (v7x megacore).
    # Ragged last tile is handled by Pallas: no jnp.pad, OOB stores dropped.
    tb = max(8, min(block_b, _round_up(pl.cdiv(B, 2), 8)))
    grid = (pl.cdiv(B, tb),)

    vmem = pltpu.MemorySpace.VMEM

    def batched(feat):
        return pl.BlockSpec((tb, feat), lambda i: (i, 0), memory_space=vmem)

    def resident(a):
        # Constant block index -> stays in VMEM across all grid iterations.
        return pl.BlockSpec(a.shape, lambda i: (0, 0), memory_space=vmem)

    in_specs = ([batched(state_dim)]
                + [batched(m.shape[1]) for m in msgs]
                + [resident(w1), resident(b1), resident(w2a)]
                + [resident(w) for w in w2b_list]
                + [resident(b2), resident(w3), resident(b3)])

    # Advisory scheduler hint (exact-ish; tanh counted as transcendental).
    flops = 2 * B * (state_dim * HID + (HID + msg_total) * HID + HID * msg_dim)
    transcendentals = B * (2 * HID + msg_total)
    bytes_accessed = 4 * (B * (state_dim + msg_total + msg_dim)
                          + state_dim * HID + (HID + msg_total) * HID
                          + HID * msg_dim + 2 * HID + msg_dim)

    out = pl.pallas_call(
        _make_kernel(num_children, use_bf16_tanh),
        out_shape=jax.ShapeDtypeStruct((B, msg_dim), jnp.float32),
        grid=grid,
        in_specs=in_specs,
        out_specs=pl.BlockSpec((tb, msg_dim), lambda i: (i, 0),
                               memory_space=vmem),
        compiler_params=pltpu.CompilerParams(
            dimension_semantics=("parallel",)),
        cost_estimate=pl.CostEstimate(flops=flops,
                                      transcendentals=transcendentals,
                                      bytes_accessed=bytes_accessed),
    )(x, *msgs, w1, b1, w2a, *w2b_list, b2, w3, b3)

    return out


def init_params(key, state_dim, msg_dim, max_children):
    """Deterministic synthetic parameters with nn.Linear-compatible shapes."""
    in2 = HID + msg_dim * max_children
    ks = jax.random.split(key, 6)

    def unif(k, shape, fan_in):
        bound = 1.0 / jnp.sqrt(float(fan_in))
        return jax.random.uniform(k, shape, jnp.float32, -bound, bound)

    w1 = unif(ks[0], (state_dim, HID), state_dim)   # fc1.weight^T
    b1 = unif(ks[1], (1, HID), state_dim)           # fc1.bias
    w2 = unif(ks[2], (in2, HID), in2)               # fc2.weight^T
    b2 = unif(ks[3], (1, HID), in2)                 # fc2.bias
    w3 = unif(ks[4], (HID, msg_dim), HID)           # fc3.weight^T
    b3 = unif(ks[5], (1, msg_dim), HID)             # fc3.bias

    w2a = w2[:HID, :]                               # rows for the fc1 part
    w2b_list = tuple(w2[HID + c * msg_dim: HID + (c + 1) * msg_dim, :]
                     for c in range(max_children))  # rows per child message
    params = (w1, b1, w2a, w2b_list, b2, w3, b3)
    return params, w2


def reference_forward(x, msgs, params, w2_full):
    """Pure-JAX reference mirroring the PyTorch code exactly."""
    w1, b1, _w2a, _w2b, b2, w3, b3 = params
    m = jnp.concatenate(list(msgs), axis=-1)

    def pt_normalize(v):
        norm = jnp.sqrt(jnp.sum(v * v, axis=-1, keepdims=True))
        return v / jnp.maximum(norm, EPS)

    h = x @ w1 + b1
    h = pt_normalize(h)
    xm = jnp.tanh(jnp.concatenate([h, m], axis=-1))
    h2 = jnp.tanh(xm @ w2_full + b2)
    h3 = h2 @ w3 + b3
    return pt_normalize(h3)


if __name__ == "__main__":
    state_dim, msg_dim, max_children = 16, 8, 2

    key = jax.random.PRNGKey(0)
    kp, kd = jax.random.split(key)
    params, w2_full = init_params(kp, state_dim, msg_dim, max_children)

    ok = True
    for batch in (8, 10):   # exercises both the exact-tile and ragged paths
        keys = jax.random.split(jax.random.fold_in(kd, batch), 1 + max_children)
        x = jax.random.normal(keys[0], (batch, state_dim), jnp.float32)
        msgs = [jax.random.normal(k, (batch, msg_dim), jnp.float32)
                for k in keys[1:]]

        ref = reference_forward(x, msgs, params, w2_full)

        # Exact-parity f32 path.
        out = jax.block_until_ready(actor_up_forward(x, msgs, params))
        ok = ok and out.shape == (batch, msg_dim)
        ok = ok and bool(jnp.allclose(out, ref, atol=1e-5, rtol=1e-5))

        # bf16 tanh / MXU-LHS fast path (v6e/v7x EUP win) -- smoke-checked at a
        # relaxed tolerance by design (bf16 ~1e-2 rel error through two tanhs).
        out_bf = jax.block_until_ready(
            actor_up_forward(x, msgs, params, use_bf16_tanh=True))
        ok = ok and bool(jnp.allclose(out_bf, ref, atol=1e-1, rtol=1e-1))

    assert ok, "mismatch vs JAX reference"
    print("KERNEL_OK")
</pallas_src>

<mosaic_0001>
module attributes {stable_mosaic.version = 11 : i64} {
  func.func @kernel(%arg0: i32, %arg1: memref<8x16xf32, #tpu.memory_space<vmem>>, %arg2: memref<8x8xf32, #tpu.memory_space<vmem>>, %arg3: memref<8x8xf32, #tpu.memory_space<vmem>>, %arg4: memref<16x64xf32, #tpu.memory_space<vmem>>, %arg5: memref<1x64xf32, #tpu.memory_space<vmem>>, %arg6: memref<64x64xf32, #tpu.memory_space<vmem>>, %arg7: memref<8x64xf32, #tpu.memory_space<vmem>>, %arg8: memref<8x64xf32, #tpu.memory_space<vmem>>, %arg9: memref<1x64xf32, #tpu.memory_space<vmem>>, %arg10: memref<64x8xf32, #tpu.memory_space<vmem>>, %arg11: memref<1x8xf32, #tpu.memory_space<vmem>>, %arg12: memref<8x8xf32, #tpu.memory_space<vmem>>) attributes {dimension_semantics = [#tpu.dimension_semantics<parallel>], iteration_bounds = array<i64: 1>, scalar_prefetch = 0 : i64, scratch_operands = 0 : i64, tpu.core_type = #tpu.core_type<tc>, window_params = [{transform_indices = @transform_0, window_bounds = array<i64: 8, 16>}, {transform_indices = @transform_1, window_bounds = array<i64: 8, 8>}, {transform_indices = @transform_2, window_bounds = array<i64: 8, 8>}, {pipeline_mode = #tpu.pipeline_mode<synchronous>, transform_indices = @transform_3, window_bounds = array<i64: 16, 64>}, {pipeline_mode = #tpu.pipeline_mode<synchronous>, transform_indices = @transform_4, window_bounds = array<i64: 1, 64>}, {pipeline_mode = #tpu.pipeline_mode<synchronous>, transform_indices = @transform_5, window_bounds = array<i64: 64, 64>}, {pipeline_mode = #tpu.pipeline_mode<synchronous>, transform_indices = @transform_6, window_bounds = array<i64: 8, 64>}, {pipeline_mode = #tpu.pipeline_mode<synchronous>, transform_indices = @transform_7, window_bounds = array<i64: 8, 64>}, {pipeline_mode = #tpu.pipeline_mode<synchronous>, transform_indices = @transform_8, window_bounds = array<i64: 1, 64>}, {pipeline_mode = #tpu.pipeline_mode<synchronous>, transform_indices = @transform_9, window_bounds = array<i64: 64, 8>}, {pipeline_mode = #tpu.pipeline_mode<synchronous>, transform_indices = @transform_10, window_bounds = array<i64: 1, 8>}, {transform_indices = @transform_11, window_bounds = array<i64: 8, 8>}]} {
    %c0 = arith.constant 0 : index
    %c0_0 = arith.constant 0 : index
    %0 = vector.load %arg1[%c0, %c0_0] : memref<8x16xf32, #tpu.memory_space<vmem>>, vector<8x16xf32>
    %c0_1 = arith.constant 0 : index
    %c0_2 = arith.constant 0 : index
    %1 = vector.load %arg4[%c0_1, %c0_2] : memref<16x64xf32, #tpu.memory_space<vmem>>, vector<16x64xf32>
    %cst = arith.constant dense<0.000000e+00> : vector<8x64xf32>
    %2 = tpu.matmul %0, %1, %cst {dimension_numbers = #tpu.dot_dimension_numbers<[1], [0], [0], [1], [0, 0, 1, 1], [], []>} : vector<8x16xf32>, vector<16x64xf32>, vector<8x64xf32> -> vector<8x64xf32>
    %c0_3 = arith.constant 0 : index
    %c0_4 = arith.constant 0 : index
    %3 = vector.load %arg5[%c0_3, %c0_4] : memref<1x64xf32, #tpu.memory_space<vmem>>, vector<1x64xf32>
    %4 = vector.broadcast %3 : vector<1x64xf32> to vector<8x64xf32>
    %5 = arith.addf %2, %4 : vector<8x64xf32>
    %6 = arith.mulf %5, %5 : vector<8x64xf32>
    %cst_5 = arith.constant dense<0.000000e+00> : vector<8xf32>
    %7 = vector.multi_reduction <add>, %6, %cst_5 [1] : vector<8x64xf32> to vector<8xf32>
    %8 = vector.shape_cast %7 : vector<8xf32> to vector<8x1xf32>
    %cst_6 = arith.constant 1.000000e-24 : f32
    %9 = vector.broadcast %cst_6 : f32 to vector<8x1xf32>
    %10 = arith.maximumf %8, %9 : vector<8x1xf32>
    %11 = math.rsqrt %10 : vector<8x1xf32>
    %12 = vector.broadcast %11 : vector<8x1xf32> to vector<8x64xf32>
    %13 = arith.mulf %5, %12 : vector<8x64xf32>
    %14 = math.tanh %13 : vector<8x64xf32>
    %c0_7 = arith.constant 0 : index
    %c0_8 = arith.constant 0 : index
    %15 = vector.load %arg6[%c0_7, %c0_8] : memref<64x64xf32, #tpu.memory_space<vmem>>, vector<64x64xf32>
    %cst_9 = arith.constant dense<0.000000e+00> : vector<8x64xf32>
    %16 = tpu.matmul %14, %15, %cst_9 {dimension_numbers = #tpu.dot_dimension_numbers<[1], [0], [0], [1], [0, 0, 1, 1], [], []>} : vector<8x64xf32>, vector<64x64xf32>, vector<8x64xf32> -> vector<8x64xf32>
    %c0_10 = arith.constant 0 : index
    %c0_11 = arith.constant 0 : index
    %17 = vector.load %arg2[%c0_10, %c0_11] : memref<8x8xf32, #tpu.memory_space<vmem>>, vector<8x8xf32>
    %18 = math.tanh %17 : vector<8x8xf32>
    %c0_12 = arith.constant 0 : index
    %c0_13 = arith.constant 0 : index
    %19 = vector.load %arg7[%c0_12, %c0_13] : memref<8x64xf32, #tpu.memory_space<vmem>>, vector<8x64xf32>
    %cst_14 = arith.constant dense<0.000000e+00> : vector<8x64xf32>
    %20 = tpu.matmul %18, %19, %cst_14 {dimension_numbers = #tpu.dot_dimension_numbers<[1], [0], [0], [1], [0, 0, 1, 1], [], []>} : vector<8x8xf32>, vector<8x64xf32>, vector<8x64xf32> -> vector<8x64xf32>
    %21 = arith.addf %16, %20 : vector<8x64xf32>
    %c0_15 = arith.constant 0 : index
    %c0_16 = arith.constant 0 : index
    %22 = vector.load %arg3[%c0_15, %c0_16] : memref<8x8xf32, #tpu.memory_space<vmem>>, vector<8x8xf32>
    %23 = math.tanh %22 : vector<8x8xf32>
    %c0_17 = arith.constant 0 : index
    %c0_18 = arith.constant 0 : index
    %24 = vector.load %arg8[%c0_17, %c0_18] : memref<8x64xf32, #tpu.memory_space<vmem>>, vector<8x64xf32>
    %cst_19 = arith.constant dense<0.000000e+00> : vector<8x64xf32>
    %25 = tpu.matmul %23, %24, %cst_19 {dimension_numbers = #tpu.dot_dimension_numbers<[1], [0], [0], [1], [0, 0, 1, 1], [], []>} : vector<8x8xf32>, vector<8x64xf32>, vector<8x64xf32> -> vector<8x64xf32>
    %26 = arith.addf %21, %25 : vector<8x64xf32>
    %c0_20 = arith.constant 0 : index
    %c0_21 = arith.constant 0 : index
    %27 = vector.load %arg9[%c0_20, %c0_21] : memref<1x64xf32, #tpu.memory_space<vmem>>, vector<1x64xf32>
    %28 = vector.broadcast %27 : vector<1x64xf32> to vector<8x64xf32>
    %29 = arith.addf %26, %28 : vector<8x64xf32>
    %30 = math.tanh %29 : vector<8x64xf32>
    %c0_22 = arith.constant 0 : index
    %c0_23 = arith.constant 0 : index
    %31 = vector.load %arg10[%c0_22, %c0_23] : memref<64x8xf32, #tpu.memory_space<vmem>>, vector<64x8xf32>
    %cst_24 = arith.constant dense<0.000000e+00> : vector<8x8xf32>
    %32 = tpu.matmul %30, %31, %cst_24 {dimension_numbers = #tpu.dot_dimension_numbers<[1], [0], [0], [1], [0, 0, 1, 1], [], []>} : vector<8x64xf32>, vector<64x8xf32>, vector<8x8xf32> -> vector<8x8xf32>
    %c0_25 = arith.constant 0 : index
    %c0_26 = arith.constant 0 : index
    %33 = vector.load %arg11[%c0_25, %c0_26] : memref<1x8xf32, #tpu.memory_space<vmem>>, vector<1x8xf32>
    %34 = vector.broadcast %33 : vector<1x8xf32> to vector<8x8xf32>
    %35 = arith.addf %32, %34 : vector<8x8xf32>
    %36 = arith.mulf %35, %35 : vector<8x8xf32>
    %cst_27 = arith.constant dense<0.000000e+00> : vector<8xf32>
    %37 = vector.multi_reduction <add>, %36, %cst_27 [1] : vector<8x8xf32> to vector<8xf32>
    %38 = vector.shape_cast %37 : vector<8xf32> to vector<8x1xf32>
    %cst_28 = arith.constant 1.000000e-24 : f32
    %39 = vector.broadcast %cst_28 : f32 to vector<8x1xf32>
    %40 = arith.maximumf %38, %39 : vector<8x1xf32>
    %41 = math.rsqrt %40 : vector<8x1xf32>
    %42 = vector.broadcast %41 : vector<8x1xf32> to vector<8x8xf32>
    %43 = arith.mulf %35, %42 : vector<8x8xf32>
    %c0_29 = arith.constant 0 : index
    %c0_30 = arith.constant 0 : index
    %44 = vector.load %arg12[%c0_29, %c0_30] : memref<8x8xf32, #tpu.memory_space<vmem>>, vector<8x8xf32>
    tpu.vector_store %arg12[%c0_29, %c0_30], %43 {strides = array<i32>} : memref<8x8xf32, #tpu.memory_space<vmem>>, vector<8x8xf32>,
    return
  }
  func.func @transform_0(%arg0: i32) -> (i32, i32) {
    %c0_i32 = arith.constant 0 : i32
    %c0_i32_0 = arith.constant 0 : i32
    return %arg0, %c0_i32 : i32, i32
  }
  func.func @transform_1(%arg0: i32) -> (i32, i32) {
    %c0_i32 = arith.constant 0 : i32
    %c0_i32_0 = arith.constant 0 : i32
    return %arg0, %c0_i32 : i32, i32
  }
  func.func @transform_2(%arg0: i32) -> (i32, i32) {
    %c0_i32 = arith.constant 0 : i32
    %c0_i32_0 = arith.constant 0 : i32
    return %arg0, %c0_i32 : i32, i32
  }
  func.func @transform_3(%arg0: i32) -> (i32, i32) {
    %c0_i32 = arith.constant 0 : i32
    %c0_i32_0 = arith.constant 0 : i32
    %c0_i32_1 = arith.constant 0 : i32
    return %c0_i32, %c0_i32_0 : i32, i32
  }
  func.func @transform_4(%arg0: i32) -> (i32, i32) {
    %c0_i32 = arith.constant 0 : i32
    %c0_i32_0 = arith.constant 0 : i32
    %c0_i32_1 = arith.constant 0 : i32
    return %c0_i32, %c0_i32_0 : i32, i32
  }
  func.func @transform_5(%arg0: i32) -> (i32, i32) {
    %c0_i32 = arith.constant 0 : i32
    %c0_i32_0 = arith.constant 0 : i32
    %c0_i32_1 = arith.constant 0 : i32
    return %c0_i32, %c0_i32_0 : i32, i32
  }
  func.func @transform_6(%arg0: i32) -> (i32, i32) {
    %c0_i32 = arith.constant 0 : i32
    %c0_i32_0 = arith.constant 0 : i32
    %c0_i32_1 = arith.constant 0 : i32
    return %c0_i32, %c0_i32_0 : i32, i32
  }
  func.func @transform_7(%arg0: i32) -> (i32, i32) {
    %c0_i32 = arith.constant 0 : i32
    %c0_i32_0 = arith.constant 0 : i32
    %c0_i32_1 = arith.constant 0 : i32
    return %c0_i32, %c0_i32_0 : i32, i32
  }
  func.func @transform_8(%arg0: i32) -> (i32, i32) {
    %c0_i32 = arith.constant 0 : i32
    %c0_i32_0 = arith.constant 0 : i32
    %c0_i32_1 = arith.constant 0 : i32
    return %c0_i32, %c0_i32_0 : i32, i32
  }
  func.func @transform_9(%arg0: i32) -> (i32, i32) {
    %c0_i32 = arith.constant 0 : i32
    %c0_i32_0 = arith.constant 0 : i32
    %c0_i32_1 = arith.constant 0 : i32
    return %c0_i32, %c0_i32_0 : i32, i32
  }
  func.func @transform_10(%arg0: i32) -> (i32, i32) {
    %c0_i32 = arith.constant 0 : i32
    %c0_i32_0 = arith.constant 0 : i32
    %c0_i32_1 = arith.constant 0 : i32
    return %c0_i32, %c0_i32_0 : i32, i32
  }
  func.func @transform_11(%arg0: i32) -> (i32, i32) {
    %c0_i32 = arith.constant 0 : i32
    %c0_i32_0 = arith.constant 0 : i32
    return %arg0, %c0_i32 : i32, i32
  }
}

</mosaic_0001>

<llo_original>
// kernel: tpu_custom_call.1
$region0: #{tpu_custom_call.1}
  #allocation0 [shape = 'u32[]', space=smem, size = 0x4, offset = 0x4, fixed_abs, tag = 'smem constant byte address 0x4 - core index']
  #allocation1 [shape = 'u32[144,128]{1,0:T(1,128)}', space=vmem, size = 0x12000, scoped, tag = 'internal scratch']
  %s0 = inlined_call_operand.hbm [shape: f32[8,16], index: 0, kind: input, shape index: {}]
  %s1 = inlined_call_operand.hbm [shape: f32[8,8], index: 1, kind: input, shape index: {}]
  %s2 = inlined_call_operand.hbm [shape: f32[8,8], index: 2, kind: input, shape index: {}]
  %s3 = inlined_call_operand.vmem [shape: f32[16,64], index: 3, kind: input, shape index: {}]
  %s4 = inlined_call_operand.vmem [shape: f32[1,64], index: 4, kind: input, shape index: {}]
  %s5 = inlined_call_operand.vmem [shape: f32[64,64], index: 5, kind: input, shape index: {}]
  %s6 = inlined_call_operand.hbm [shape: f32[8,64], index: 6, kind: input, shape index: {}]
  %s7 = inlined_call_operand.vmem [shape: f32[8,64], index: 7, kind: input, shape index: {}]
  %s8 = inlined_call_operand.vmem [shape: f32[1,64], index: 8, kind: input, shape index: {}]
  %s9 = inlined_call_operand.vmem [shape: f32[64,8], index: 9, kind: input, shape index: {}]
  %s10 = inlined_call_operand.vmem [shape: f32[1,8], index: 10, kind: input, shape index: {}]
  %s11 = inlined_call_operand.hbm [shape: f32[8,8], index: 11, kind: output, shape index: {}]
  %s12 = sld [smem:[#allocation0]]
  $region70: #{tpu_custom_call.1} parent=0
    _
  %s14 = ssub.s32 1, %s12
  %s15 = scalar_select 0, %s14, %s12
  $region1: #{tpu_custom_call.1} parent=0
    #allocation2 [shape = 'u8[4096]{0}', space=vmem, size = 0x1000, scoped, tag = 'input window, operand 0, single buffered']
    #allocation3 [shape = 's32[1]{0}', space=sflag, size = 0x4, scoped, tag = 'scoped memory for tpu_custom_call.1']
    #allocation4 [shape = 's32[1]{0}', space=sflag, size = 0x4, scoped, tag = 'scoped memory for tpu_custom_call.1']
    #allocation5 [shape = 'u8[4096]{0}', space=vmem, size = 0x1000, scoped, tag = 'input window, operand 1, single buffered']
    #allocation6 [shape = 's32[1]{0}', space=sflag, size = 0x4, scoped, tag = 'scoped memory for tpu_custom_call.1']
    #allocation7 [shape = 'u8[4096]{0}', space=vmem, size = 0x1000, scoped, tag = 'input window, operand 2, single buffered']
    #allocation8 [shape = 'u8[4096]{0}', space=vmem, size = 0x1000, scoped, tag = 'input window, operand 6, single buffered']
    #allocation9 [shape = 's32[1]{0}', space=sflag, size = 0x4, scoped, tag = 'scoped memory for tpu_custom_call.1']
    #allocation10 [shape = 'u8[4096]{0}', space=vmem, size = 0x1000, scoped, tag = 'output window, operand 0, single buffered']
    %16 = vsyncpa [#allocation3], 0
    %17 = vsyncpa [#allocation6], 0
    %18 = vsyncpa [#allocation9], 0
    %19 = vsyncpa [#allocation4], 0
    // Predicated region
    $region2: #{tpu_custom_call.1} parent=1 // pred_check
      _
    $region3: #{tpu_custom_call.1} parent=1 // pred_check_branch
      %21 = sbr.rel (0) target = $region5
    $region4: #{tpu_custom_call.1} parent=1 // pred_region
      %s23 = ssub.s32 128, 128
      %24 = vsyncadd [#allocation3], %s23
      %s26 = sshll.u32 [#allocation2], 4
      %s27 = int_to_ptr.vmem [resolvable:$true] %s26
      %29 = dma.hbm_to_vmem [thread:$0]  %s0, 128, %s27, [#allocation3]
    $region5: #{tpu_custom_call.1} parent=1 // pred_fallthru
      _
    // Predicated region
    $region6: #{tpu_custom_call.1} parent=1 // pred_check
      _
    $region7: #{tpu_custom_call.1} parent=1 // pred_check_branch
      %31 = sbr.rel (0) target = $region9
    $region8: #{tpu_custom_call.1} parent=1 // pred_region
      %s33 = ssub.s32 128, 128
      %34 = vsyncadd [#allocation6], %s33
      %s36 = sshll.u32 [#allocation5], 4
      %s37 = int_to_ptr.vmem [resolvable:$true] %s36
      %39 = dma.hbm_to_vmem [thread:$0]  %s1, 128, %s37, [#allocation6]
    $region9: #{tpu_custom_call.1} parent=1 // pred_fallthru
      _
    // Predicated region
    $region10: #{tpu_custom_call.1} parent=1 // pred_check
      _
    $region11: #{tpu_custom_call.1} parent=1 // pred_check_branch
      %41 = sbr.rel (0) target = $region13
    $region12: #{tpu_custom_call.1} parent=1 // pred_region
      %s43 = ssub.s32 128, 128
      %44 = vsyncadd [#allocation6], %s43
      %s46 = sshll.u32 [#allocation7], 4
      %s47 = int_to_ptr.vmem [resolvable:$true] %s46
      %49 = dma.hbm_to_vmem [thread:$0]  %s2, 128, %s47, [#allocation6]
    $region13: #{tpu_custom_call.1} parent=1 // pred_fallthru
      _
    // Predicated region
    $region14: #{tpu_custom_call.1} parent=1 // pred_check
      _
    $region15: #{tpu_custom_call.1} parent=1 // pred_check_branch
      %51 = sbr.rel (0) target = $region17
    $region16: #{tpu_custom_call.1} parent=1 // pred_region
      _
    $region17: #{tpu_custom_call.1} parent=1 // pred_fallthru
      _
    // Predicated region
    $region18: #{tpu_custom_call.1} parent=1 // pred_check
      _
    $region19: #{tpu_custom_call.1} parent=1 // pred_check_branch
      %53 = sbr.rel (0) target = $region21
    $region20: #{tpu_custom_call.1} parent=1 // pred_region
      _
    $region21: #{tpu_custom_call.1} parent=1 // pred_fallthru
      _
    // Predicated region
    $region22: #{tpu_custom_call.1} parent=1 // pred_check
      _
    $region23: #{tpu_custom_call.1} parent=1 // pred_check_branch
      %55 = sbr.rel (0) target = $region25
    $region24: #{tpu_custom_call.1} parent=1 // pred_region
      _
    $region25: #{tpu_custom_call.1} parent=1 // pred_fallthru
      _
    // Predicated region
    $region26: #{tpu_custom_call.1} parent=1 // pred_check
      _
    $region27: #{tpu_custom_call.1} parent=1 // pred_check_branch
      %57 = sbr.rel (0) target = $region29
    $region28: #{tpu_custom_call.1} parent=1 // pred_region
      %s59 = ssub.s32 128, 128
      %60 = vsyncadd [#allocation9], %s59
      %s62 = sshll.u32 [#allocation8], 4
      %s63 = int_to_ptr.vmem [resolvable:$true] %s62
      %65 = dma.hbm_to_vmem [thread:$0]  %s6, 128, %s63, [#allocation9]
    $region29: #{tpu_custom_call.1} parent=1 // pred_fallthru
      _
    // Predicated region
    $region30: #{tpu_custom_call.1} parent=1 // pred_check
      _
    $region31: #{tpu_custom_call.1} parent=1 // pred_check_branch
      %67 = sbr.rel (0) target = $region33
    $region32: #{tpu_custom_call.1} parent=1 // pred_region
      _
    $region33: #{tpu_custom_call.1} parent=1 // pred_fallthru
      _
    // Predicated region
    $region34: #{tpu_custom_call.1} parent=1 // pred_check
      _
    $region35: #{tpu_custom_call.1} parent=1 // pred_check_branch
      %69 = sbr.rel (0) target = $region37
    $region36: #{tpu_custom_call.1} parent=1 // pred_region
      _
    $region37: #{tpu_custom_call.1} parent=1 // pred_fallthru
      _
    // Predicated region
    $region38: #{tpu_custom_call.1} parent=1 // pred_check
      _
    $region39: #{tpu_custom_call.1} parent=1 // pred_check_branch
      %71 = sbr.rel (0) target = $region41
    $region40: #{tpu_custom_call.1} parent=1 // pred_region
      _
    $region41: #{tpu_custom_call.1} parent=1 // pred_fallthru
      _
    // Predicated region
    $region42: #{tpu_custom_call.1} parent=1 // pred_check
      _
    $region43: #{tpu_custom_call.1} parent=1 // pred_check_branch
      %73 = sbr.rel (0) target = $region45
    $region44: #{tpu_custom_call.1} parent=1 // pred_region
      _
    $region45: #{tpu_custom_call.1} parent=1 // pred_fallthru
      _
    // Predicated region
    $region46: #{tpu_custom_call.1} parent=1 // pred_check
      _
    $region47: #{tpu_custom_call.1} parent=1 // pred_check_branch
      %75 = sbr.rel (0) target = $region49
    $region48: #{tpu_custom_call.1} parent=1 // pred_region
      %76 = dma.done [#allocation3], 128
    $region49: #{tpu_custom_call.1} parent=1 // pred_fallthru
      _
    // Predicated region
    $region50: #{tpu_custom_call.1} parent=1 // pred_check
      _
    $region51: #{tpu_custom_call.1} parent=1 // pred_check_branch
      %78 = sbr.rel (0) target = $region53
    $region52: #{tpu_custom_call.1} parent=1 // pred_region
      %79 = dma.done [#allocation6], 128
    $region53: #{tpu_custom_call.1} parent=1 // pred_fallthru
      _
    // Predicated region
    $region54: #{tpu_custom_call.1} parent=1 // pred_check
      _
    $region55: #{tpu_custom_call.1} parent=1 // pred_check_branch
      %81 = sbr.rel (0) target = $region57
    $region56: #{tpu_custom_call.1} parent=1 // pred_region
      %82 = dma.done [#allocation6], 128
    $region57: #{tpu_custom_call.1} parent=1 // pred_fallthru
      _
    // Predicated region
    $region58: #{tpu_custom_call.1} parent=1 // pred_check
      _
    $region59: #{tpu_custom_call.1} parent=1 // pred_check_branch
      %84 = sbr.rel (0) target = $region61
    $region60: #{tpu_custom_call.1} parent=1 // pred_region
      %85 = dma.done [#allocation9], 128
    $region61: #{tpu_custom_call.1} parent=1 // pred_fallthru
      _
    %v86 = vld [vmem:[#allocation2] sm:$0xff]
    %v87 = vld [vmem:[%s3] sm:$0xff]
    %v88 = vld [vmem:[%s3 + $0x8] sm:$0xff]
    %v89 = vld [vmem:[%s4] sm:$0x1]
    %v91 = vlaneseq
    %v92 = vshrl.u32 %v91, 7
    %v93 = vsub.s32 0, %v92
    %v94 = vrot.slane %v89, %v93
    %vm96 = vcmask 130048
    %v98 = vsel %vm96, %v86, 0
    %100 = vmatprep.subr.mxu0 0.0
    %101 = vmatpush1.msra.mxu0 %v87
    %102 = vmatprep.subr.mxu0 0.0
    %103 = vmatpush1.msra.mxu0 %v88
    %104 = vmatprep.subr.mxu0 0.0
    %105 = vmatpush1.msra.mxu0 0.0
    %106 = vmatprep.subr.mxu0 0.0
    %107 = vmatpush1.msra.mxu0 0.0
    %108 = vmatprep.subr.mxu0 0.0
    %109 = vmatpush1.msra.mxu0 0.0
    %110 = vmatprep.subr.mxu0 0.0
    %111 = vmatpush1.msra.mxu0 0.0
    %112 = vmatprep.subr.mxu0 0.0
    %113 = vmatpush1.msra.mxu0 0.0
    %114 = vmatprep.subr.mxu0 0.0
    %115 = vmatpush1.msra.mxu0 0.0
    %116 = vmatprep.subr.mxu0 0.0
    %117 = vmatpush1.msra.mxu0 0.0
    %118 = vmatprep.subr.mxu0 0.0
    %119 = vmatpush1.msra.mxu0 0.0
    %120 = vmatprep.subr.mxu0 0.0
    %121 = vmatpush1.msra.mxu0 0.0
    %122 = vmatprep.subr.mxu0 0.0
    %123 = vmatpush1.msra.mxu0 0.0
    %124 = vmatprep.subr.mxu0 0.0
    %125 = vmatpush1.msra.mxu0 0.0
    %126 = vmatprep.subr.mxu0 0.0
    %127 = vmatpush1.msra.mxu0 0.0
    %128 = vmatprep.subr.mxu0 0.0
    %129 = vmatpush1.msra.mxu0 0.0
    %130 = vmatprep.subr.mxu0 0.0
    %131 = vmatpush1.msra.mxu0 0.0
    %132 = vmatprep.subr.mxu0 0.0
    %133 = vmatpush1.msra.mxu0 0.0
    %134 = vmatprep.subr.mxu0 0.0
    %135 = vmatpush1.msra.mxu0 0.0
    %136 = vmatprep.subr.mxu0 0.0
    %137 = vmatpush1.msra.mxu0 0.0
    %138 = vmatprep.subr.mxu0 0.0
    %139 = vmatpush1.msra.mxu0 0.0
    %140 = vmatprep.subr.mxu0 0.0
    %141 = vmatpush1.msra.mxu0 0.0
    %142 = vmatprep.subr.mxu0 0.0
    %143 = vmatpush1.msra.mxu0 0.0
    %144 = vmatprep.subr.mxu0 0.0
    %145 = vmatpush1.msra.mxu0 0.0
    %146 = vmatprep.subr.mxu0 0.0
    %147 = vmatpush1.msra.mxu0 0.0
    %148 = vmatprep.subr.mxu0 0.0
    %149 = vmatpush1.msra.mxu0 0.0
    %150 = vmatprep.subr.mxu0 0.0
    %151 = vmatpush1.msra.mxu0 0.0
    %152 = vmatprep.subr.mxu0 0.0
    %153 = vmatpush1.msra.mxu0 0.0
    %154 = vmatprep.subr.mxu0 0.0
    %155 = vmatpush1.msra.mxu0 0.0
    %156 = vmatprep.subr.mxu0 0.0
    %157 = vmatpush1.msra.mxu0 0.0
    %158 = vmatprep.subr.mxu0 0.0
    %159 = vmatpush1.msra.mxu0 0.0
    %160 = vmatprep.subr.mxu0 0.0
    %161 = vmatpush1.msra.mxu0 0.0
    %162 = vmatprep.subr.mxu0 0.0
    %163 = vmatpush1.msra.mxu0 0.0
    %164 = vmatprep.mubr.f32.mxu0 0.0
    %165 = vmatmul.mubr.f32.gmra.mrb[0].mxu0 %v98
    %v166 = vpop.f32.mrb[0].mxu0
    %v167 = vadd.f32 %v94, %v166
    %v168 = vpop.f32.mrb[0].mxu0
    %169 = vdwg.mxu0
    %v170 = vmul.f32 %v167, %v167
    %vm171 = vcmask 523264
    %v172 = vsel %vm171, %v170, 0.0
    %173 = vadd.xlane.f32.xlu0 %v172
    %v174 = vpop.xlane.xlu0 %173
    %v175 = vmax.f32 %v174, 1e-24
    %v176 = vrsqrt.pop %v175
    %v177 = vmul.f32 %v167, %v176
    %v178 = vtanh.pop %v177
    %v179 = vld [vmem:[%s5] sm:$0xff]
    %v180 = vld [vmem:[%s5 + $0x8] sm:$0xff]
    %v181 = vld [vmem:[%s5 + $0x10] sm:$0xff]
    %v182 = vld [vmem:[%s5 + $0x18] sm:$0xff]
    %v183 = vld [vmem:[%s5 + $0x20] sm:$0xff]
    %v184 = vld [vmem:[%s5 + $0x28] sm:$0xff]
    %v185 = vld [vmem:[%s5 + $0x30] sm:$0xff]
    %v186 = vld [vmem:[%s5 + $0x38] sm:$0xff]
    %v187 = vld [vmem:[#allocation5] sm:$0xff]
    %v188 = vtanh.pop %v187
    %v189 = vld [vmem:[#allocation8] sm:$0xff]
    %vm190 = vcmask 64512
    %v192 = vsel %vm190, %v188, 0
    %194 = vmatprep.subr.mxu0 0.0
    %195 = vmatpush1.msra.mxu0 %v189
    %196 = vmatprep.subr.mxu0 0.0
    %197 = vmatpush1.msra.mxu0 0.0
    %198 = vmatprep.subr.mxu0 0.0
    %199 = vmatpush1.msra.mxu0 0.0
    %200 = vmatprep.subr.mxu0 0.0
    %201 = vmatpush1.msra.mxu0 0.0
    %202 = vmatprep.subr.mxu0 0.0
    %203 = vmatpush1.msra.mxu0 0.0
    %204 = vmatprep.subr.mxu0 0.0
    %205 = vmatpush1.msra.mxu0 0.0
    %206 = vmatprep.subr.mxu0 0.0
    %207 = vmatpush1.msra.mxu0 0.0
    %208 = vmatprep.subr.mxu0 0.0
    %209 = vmatpush1.msra.mxu0 0.0
    %210 = vmatprep.subr.mxu0 0.0
    %211 = vmatpush1.msra.mxu0 0.0
    %212 = vmatprep.subr.mxu0 0.0
    %213 = vmatpush1.msra.mxu0 0.0
    %214 = vmatprep.subr.mxu0 0.0
    %215 = vmatpush1.msra.mxu0 0.0
    %216 = vmatprep.subr.mxu0 0.0
    %217 = vmatpush1.msra.mxu0 0.0
    %218 = vmatprep.subr.mxu0 0.0
    %219 = vmatpush1.msra.mxu0 0.0
    %220 = vmatprep.subr.mxu0 0.0
    %221 = vmatpush1.msra.mxu0 0.0
    %222 = vmatprep.subr.mxu0 0.0
    %223 = vmatpush1.msra.mxu0 0.0
    %224 = vmatprep.subr.mxu0 0.0
    %225 = vmatpush1.msra.mxu0 0.0
    %226 = vmatprep.subr.mxu0 0.0
    %227 = vmatpush1.msra.mxu0 0.0
    %228 = vmatprep.subr.mxu0 0.0
    %229 = vmatpush1.msra.mxu0 0.0
    %230 = vmatprep.subr.mxu0 0.0
    %231 = vmatpush1.msra.mxu0 0.0
    %232 = vmatprep.subr.mxu0 0.0
    %233 = vmatpush1.msra.mxu0 0.0
    %234 = vmatprep.subr.mxu0 0.0
    %235 = vmatpush1.msra.mxu0 0.0
    %236 = vmatprep.subr.mxu0 0.0
    %237 = vmatpush1.msra.mxu0 0.0
    %238 = vmatprep.subr.mxu0 0.0
    %239 = vmatpush1.msra.mxu0 0.0
    %240 = vmatprep.subr.mxu0 0.0
    %241 = vmatpush1.msra.mxu0 0.0
    %242 = vmatprep.subr.mxu0 0.0
    %243 = vmatpush1.msra.mxu0 0.0
    %244 = vmatprep.subr.mxu0 0.0
    %245 = vmatpush1.msra.mxu0 0.0
    %246 = vmatprep.subr.mxu0 0.0
    %247 = vmatpush1.msra.mxu0 0.0
    %248 = vmatprep.subr.mxu0 0.0
    %249 = vmatpush1.msra.mxu0 0.0
    %250 = vmatprep.subr.mxu0 0.0
    %251 = vmatpush1.msra.mxu0 0.0
    %252 = vmatprep.subr.mxu0 0.0
    %253 = vmatpush1.msra.mxu0 0.0
    %254 = vmatprep.subr.mxu0 0.0
    %255 = vmatpush1.msra.mxu0 0.0
    %256 = vmatprep.subr.mxu0 0.0
    %257 = vmatpush1.msra.mxu0 0.0
    %258 = vmatprep.mubr.f32.mxu0 0.0
    %259 = vmatmul.mubr.f32.gmra.mrb[0].mxu0 %v192
    %v260 = vpop.f32.mrb[0].mxu0
    %v261 = vadd.f32 0.0, %v260
    %v262 = vpop.f32.mrb[0].mxu0
    %263 = vdwg.mxu0
    %v265 = vsel %vm171, %v178, 0
    %267 = vmatprep.subr.mxu0 0.0
    %268 = vmatpush1.msra.mxu0 %v179
    %269 = vmatprep.subr.mxu0 0.0
    %270 = vmatpush1.msra.mxu0 %v180
    %271 = vmatprep.subr.mxu0 0.0
    %272 = vmatpush1.msra.mxu0 %v181
    %273 = vmatprep.subr.mxu0 0.0
    %274 = vmatpush1.msra.mxu0 %v182
    %275 = vmatprep.subr.mxu0 0.0
    %276 = vmatpush1.msra.mxu0 %v183
    %277 = vmatprep.subr.mxu0 0.0
    %278 = vmatpush1.msra.mxu0 %v184
    %279 = vmatprep.subr.mxu0 0.0
    %280 = vmatpush1.msra.mxu0 %v185
    %281 = vmatprep.subr.mxu0 0.0
    %282 = vmatpush1.msra.mxu0 %v186
    %283 = vmatprep.subr.mxu0 0.0
    %284 = vmatpush1.msra.mxu0 0.0
    %285 = vmatprep.subr.mxu0 0.0
    %286 = vmatpush1.msra.mxu0 0.0
    %287 = vmatprep.subr.mxu0 0.0
    %288 = vmatpush1.msra.mxu0 0.0
    %289 = vmatprep.subr.mxu0 0.0
    %290 = vmatpush1.msra.mxu0 0.0
    %291 = vmatprep.subr.mxu0 0.0
    %292 = vmatpush1.msra.mxu0 0.0
    %293 = vmatprep.subr.mxu0 0.0
    %294 = vmatpush1.msra.mxu0 0.0
    %295 = vmatprep.subr.mxu0 0.0
    %296 = vmatpush1.msra.mxu0 0.0
    %297 = vmatprep.subr.mxu0 0.0
    %298 = vmatpush1.msra.mxu0 0.0
    %299 = vmatprep.subr.mxu0 0.0
    %300 = vmatpush1.msra.mxu0 0.0
    %301 = vmatprep.subr.mxu0 0.0
    %302 = vmatpush1.msra.mxu0 0.0
    %303 = vmatprep.subr.mxu0 0.0
    %304 = vmatpush1.msra.mxu0 0.0
    %305 = vmatprep.subr.mxu0 0.0
    %306 = vmatpush1.msra.mxu0 0.0
    %307 = vmatprep.subr.mxu0 0.0
    %308 = vmatpush1.msra.mxu0 0.0
    %309 = vmatprep.subr.mxu0 0.0
    %310 = vmatpush1.msra.mxu0 0.0
    %311 = vmatprep.subr.mxu0 0.0
    %312 = vmatpush1.msra.mxu0 0.0
    %313 = vmatprep.subr.mxu0 0.0
    %314 = vmatpush1.msra.mxu0 0.0
    %315 = vmatprep.subr.mxu0 0.0
    %316 = vmatpush1.msra.mxu0 0.0
    %317 = vmatprep.subr.mxu0 0.0
    %318 = vmatpush1.msra.mxu0 0.0
    %319 = vmatprep.subr.mxu0 0.0
    %320 = vmatpush1.msra.mxu0 0.0
    %321 = vmatprep.subr.mxu0 0.0
    %322 = vmatpush1.msra.mxu0 0.0
    %323 = vmatprep.subr.mxu0 0.0
    %324 = vmatpush1.msra.mxu0 0.0
    %325 = vmatprep.subr.mxu0 0.0
    %326 = vmatpush1.msra.mxu0 0.0
    %327 = vmatprep.subr.mxu0 0.0
    %328 = vmatpush1.msra.mxu0 0.0
    %329 = vmatprep.subr.mxu0 0.0
    %330 = vmatpush1.msra.mxu0 0.0
    %331 = vmatprep.mubr.f32.mxu0 0.0
    %332 = vmatmul.mubr.f32.gmra.mrb[0].mxu0 %v265
    %v333 = vpop.f32.mrb[0].mxu0
    %v334 = vadd.f32 %v261, %v333
    %v335 = vpop.f32.mrb[0].mxu0
    %336 = vdwg.mxu0
    %v337 = vld [vmem:[#allocation7] sm:$0xff]
    %v338 = vtanh.pop %v337
    %v339 = vld [vmem:[%s7] sm:$0xff]
    %v341 = vsel %vm190, %v338, 0
    %343 = vmatprep.subr.mxu0 0.0
    %344 = vmatpush1.msra.mxu0 %v339
    %345 = vmatprep.subr.mxu0 0.0
    %346 = vmatpush1.msra.mxu0 0.0
    %347 = vmatprep.subr.mxu0 0.0
    %348 = vmatpush1.msra.mxu0 0.0
    %349 = vmatprep.subr.mxu0 0.0
    %350 = vmatpush1.msra.mxu0 0.0
    %351 = vmatprep.subr.mxu0 0.0
    %352 = vmatpush1.msra.mxu0 0.0
    %353 = vmatprep.subr.mxu0 0.0
    %354 = vmatpush1.msra.mxu0 0.0
    %355 = vmatprep.subr.mxu0 0.0
    %356 = vmatpush1.msra.mxu0 0.0
    %357 = vmatprep.subr.mxu0 0.0
    %358 = vmatpush1.msra.mxu0 0.0
    %359 = vmatprep.subr.mxu0 0.0
    %360 = vmatpush1.msra.mxu0 0.0
    %361 = vmatprep.subr.mxu0 0.0
    %362 = vmatpush1.msra.mxu0 0.0
    %363 = vmatprep.subr.mxu0 0.0
    %364 = vmatpush1.msra.mxu0 0.0
    %365 = vmatprep.subr.mxu0 0.0
    %366 = vmatpush1.msra.mxu0 0.0
    %367 = vmatprep.subr.mxu0 0.0
    %368 = vmatpush1.msra.mxu0 0.0
    %369 = vmatprep.subr.mxu0 0.0
    %370 = vmatpush1.msra.mxu0 0.0
    %371 = vmatprep.subr.mxu0 0.0
    %372 = vmatpush1.msra.mxu0 0.0
    %373 = vmatprep.subr.mxu0 0.0
    %374 = vmatpush1.msra.mxu0 0.0
    %375 = vmatprep.subr.mxu0 0.0
    %376 = vmatpush1.msra.mxu0 0.0
    %377 = vmatprep.subr.mxu0 0.0
    %378 = vmatpush1.msra.mxu0 0.0
    %379 = vmatprep.subr.mxu0 0.0
    %380 = vmatpush1.msra.mxu0 0.0
    %381 = vmatprep.subr.mxu0 0.0
    %382 = vmatpush1.msra.mxu0 0.0
    %383 = vmatprep.subr.mxu0 0.0
    %384 = vmatpush1.msra.mxu0 0.0
    %385 = vmatprep.subr.mxu0 0.0
    %386 = vmatpush1.msra.mxu0 0.0
    %387 = vmatprep.subr.mxu0 0.0
    %388 = vmatpush1.msra.mxu0 0.0
    %389 = vmatprep.subr.mxu0 0.0
    %390 = vmatpush1.msra.mxu0 0.0
    %391 = vmatprep.subr.mxu0 0.0
    %392 = vmatpush1.msra.mxu0 0.0
    %393 = vmatprep.subr.mxu0 0.0
    %394 = vmatpush1.msra.mxu0 0.0
    %395 = vmatprep.subr.mxu0 0.0
    %396 = vmatpush1.msra.mxu0 0.0
    %397 = vmatprep.subr.mxu0 0.0
    %398 = vmatpush1.msra.mxu0 0.0
    %399 = vmatprep.subr.mxu0 0.0
    %400 = vmatpush1.msra.mxu0 0.0
    %401 = vmatprep.subr.mxu0 0.0
    %402 = vmatpush1.msra.mxu0 0.0
    %403 = vmatprep.subr.mxu0 0.0
    %404 = vmatpush1.msra.mxu0 0.0
    %405 = vmatprep.subr.mxu0 0.0
    %406 = vmatpush1.msra.mxu0 0.0
    %407 = vmatprep.mubr.f32.mxu0 0.0
    %408 = vmatmul.mubr.f32.gmra.mrb[0].mxu0 %v341
    %v409 = vpop.f32.mrb[0].mxu0
    %v410 = vadd.f32 0.0, %v409
    %v411 = vpop.f32.mrb[0].mxu0
    %412 = vdwg.mxu0
    %v413 = vadd.f32 %v334, %v410
    %v414 = vld [vmem:[%s8] sm:$0x1]
    %v416 = vlaneseq
    %v417 = vshrl.u32 %v416, 7
    %v418 = vsub.s32 0, %v417
    %v419 = vrot.slane %v414, %v418
    %v421 = vadd.f32 %v413, %v419
    %v422 = vtanh.pop %v421
    %v423 = vld [vmem:[%s9] sm:$0xff]
    %v424 = vld [vmem:[%s9 + $0x8] sm:$0xff]
    %v425 = vld [vmem:[%s9 + $0x10] sm:$0xff]
    %v426 = vld [vmem:[%s9 + $0x18] sm:$0xff]
    %v427 = vld [vmem:[%s9 + $0x20] sm:$0xff]
    %v428 = vld [vmem:[%s9 + $0x28] sm:$0xff]
    %v429 = vld [vmem:[%s9 + $0x30] sm:$0xff]
    %v430 = vld [vmem:[%s9 + $0x38] sm:$0xff]
    %v431 = vld [vmem:[%s10] sm:$0x1]
    %v433 = vlaneseq
    %v434 = vshrl.u32 %v433, 7
    %v435 = vsub.s32 0, %v434
    %v436 = vrot.slane %v431, %v435
    %v439 = vsel %vm171, %v422, 0
    %441 = vmatprep.subr.mxu0 0.0
    %442 = vmatpush1.msra.mxu0 %v423
    %443 = vmatprep.subr.mxu0 0.0
    %444 = vmatpush1.msra.mxu0 %v424
    %445 = vmatprep.subr.mxu0 0.0
    %446 = vmatpush1.msra.mxu0 %v425
    %447 = vmatprep.subr.mxu0 0.0
    %448 = vmatpush1.msra.mxu0 %v426
    %449 = vmatprep.subr.mxu0 0.0
    %450 = vmatpush1.msra.mxu0 %v427
    %451 = vmatprep.subr.mxu0 0.0
    %452 = vmatpush1.msra.mxu0 %v428
    %453 = vmatprep.subr.mxu0 0.0
    %454 = vmatpush1.msra.mxu0 %v429
    %455 = vmatprep.subr.mxu0 0.0
    %456 = vmatpush1.msra.mxu0 %v430
    %457 = vmatprep.subr.mxu0 0.0
    %458 = vmatpush1.msra.mxu0 0.0
    %459 = vmatprep.subr.mxu0 0.0
    %460 = vmatpush1.msra.mxu0 0.0
    %461 = vmatprep.subr.mxu0 0.0
    %462 = vmatpush1.msra.mxu0 0.0
    %463 = vmatprep.subr.mxu0 0.0
    %464 = vmatpush1.msra.mxu0 0.0
    %465 = vmatprep.subr.mxu0 0.0
    %466 = vmatpush1.msra.mxu0 0.0
    %467 = vmatprep.subr.mxu0 0.0
    %468 = vmatpush1.msra.mxu0 0.0
    %469 = vmatprep.subr.mxu0 0.0
    %470 = vmatpush1.msra.mxu0 0.0
    %471 = vmatprep.subr.mxu0 0.0
    %472 = vmatpush1.msra.mxu0 0.0
    %473 = vmatprep.subr.mxu0 0.0
    %474 = vmatpush1.msra.mxu0 0.0
    %475 = vmatprep.subr.mxu0 0.0
    %476 = vmatpush1.msra.mxu0 0.0
    %477 = vmatprep.subr.mxu0 0.0
    %478 = vmatpush1.msra.mxu0 0.0
    %479 = vmatprep.subr.mxu0 0.0
    %480 = vmatpush1.msra.mxu0 0.0
    %481 = vmatprep.subr.mxu0 0.0
    %482 = vmatpush1.msra.mxu0 0.0
    %483 = vmatprep.subr.mxu0 0.0
    %484 = vmatpush1.msra.mxu0 0.0
    %485 = vmatprep.subr.mxu0 0.0
    %486 = vmatpush1.msra.mxu0 0.0
    %487 = vmatprep.subr.mxu0 0.0
    %488 = vmatpush1.msra.mxu0 0.0
    %489 = vmatprep.subr.mxu0 0.0
    %490 = vmatpush1.msra.mxu0 0.0
    %491 = vmatprep.subr.mxu0 0.0
    %492 = vmatpush1.msra.mxu0 0.0
    %493 = vmatprep.subr.mxu0 0.0
    %494 = vmatpush1.msra.mxu0 0.0
    %495 = vmatprep.subr.mxu0 0.0
    %496 = vmatpush1.msra.mxu0 0.0
    %497 = vmatprep.subr.mxu0 0.0
    %498 = vmatpush1.msra.mxu0 0.0
    %499 = vmatprep.subr.mxu0 0.0
    %500 = vmatpush1.msra.mxu0 0.0
    %501 = vmatprep.subr.mxu0 0.0
    %502 = vmatpush1.msra.mxu0 0.0
    %503 = vmatprep.subr.mxu0 0.0
    %504 = vmatpush1.msra.mxu0 0.0
    %505 = vmatprep.mubr.f32.mxu0 0.0
    %506 = vmatmul.mubr.f32.gmra.mrb[0].mxu0 %v439
    %v507 = vpop.f32.mrb[0].mxu0
    %v508 = vadd.f32 %v436, %v507
    %v509 = vpop.f32.mrb[0].mxu0
    %510 = vdwg.mxu0
    %v511 = vmul.f32 %v508, %v508
    %v512 = vsel %vm190, %v511, 0.0
    %513 = vadd.xlane.f32.xlu0 %v512
    %v514 = vpop.xlane.xlu0 %513
    %v515 = vmax.f32 %v514, 1e-24
    %v516 = vrsqrt.pop %v515
    %v517 = vmul.f32 %v508, %v516
    %518 = vst.msk [vmem:[#allocation10] sm:$0xff] %vm190, %v517
    // Predicated region
    $region62: #{tpu_custom_call.1} parent=1 // pred_check
      _
    $region63: #{tpu_custom_call.1} parent=1 // pred_check_branch
      %520 = sbr.rel (0) target = $region65
    $region64: #{tpu_custom_call.1} parent=1 // pred_region
      %s522 = ssub.s32 128, 128
      %523 = vsyncadd [#allocation4], %s522
      %s525 = sshll.u32 [#allocation10], 4
      %s526 = int_to_ptr.vmem [resolvable:$true] %s525
      %528 = dma.vmem_to_hbm [thread:$0]  %s526, 128, %s11, [#allocation4]
    $region65: #{tpu_custom_call.1} parent=1 // pred_fallthru
      _
    // Predicated region
    $region66: #{tpu_custom_call.1} parent=1 // pred_check
      _
    $region67: #{tpu_custom_call.1} parent=1 // pred_check_branch
      %530 = sbr.rel (0) target = $region69
    $region68: #{tpu_custom_call.1} parent=1 // pred_region
      %531 = dma.done [#allocation4], 128
    $region69: #{tpu_custom_call.1} parent=1 // pred_fallthru
      _
    %532 = vsyncpa [#allocation3], 1
    %533 = vsyncpa [#allocation6], 1
    %534 = vsyncpa [#allocation9], 1
    %535 = vsyncpa [#allocation4], 1

</llo_original>
